<compile_context>
chip_gen: v7x
topology: tpu7x:2x2x1
jax: 0.10.0
libtpu: 0.0.40
codegen_flags: <defaults>
</compile_context>

<pallas_src>
import functools

import jax
import jax.numpy as jnp
from jax import lax
from jax.experimental import pallas as pl
from jax.experimental.pallas import tpu as pltpu


def _round_up(x: int, m: int) -> int:
    return ((x + m - 1) // m) * m


def _bow_kernel(x_ref, wt_ref, b_ref, o_ref, acc_ref, *, feat_dim, tf):
    # x_ref: (tb, tf) doc tile, wt_ref: (L, tf), b_ref: (1, L),
    # o_ref: (tb, L), acc_ref: (tb, L) f32 accumulator resident across k.
    k = pl.program_id(1)

    @pl.when(k == 0)
    def _init():
        acc_ref[...] = jnp.zeros_like(acc_ref)

    x = x_ref[...]
    if feat_dim % tf != 0:
        # Ragged last F tile: local columns >= feat_dim - k*tf are stale VMEM
        # (possibly NaN/Inf) -- zero them before the contraction.  For the
        # non-last tiles the predicate is all-true (cheap VPU select, fully
        # hidden under the HBM-bound stream).
        col = lax.broadcasted_iota(jnp.int32, x.shape, 1)
        x = jnp.where(col < (feat_dim - k * tf), x, jnp.zeros_like(x))

    # (tb, tf) . (L, tf)^T -> (tb, L), accumulated in f32 on the MXU.
    acc_ref[...] += lax.dot_general(
        x,
        wt_ref[...],
        dimension_numbers=(((1,), (1,)), ((), ())),
        preferred_element_type=jnp.float32,
    )

    @pl.when(k == pl.num_programs(1) - 1)
    def _finalize():
        logits = acc_ref[...] + b_ref[...].astype(jnp.float32)
        # log_softmax over the label axis (PyTorch dim=1 on a (B, L) tensor).
        m = jnp.max(logits, axis=-1, keepdims=True)
        shifted = logits - m
        lse = jnp.log(jnp.sum(jnp.exp(shifted), axis=-1, keepdims=True))
        o_ref[...] = (shifted - lse).astype(o_ref.dtype)


_TARGET_TILE_BYTES = 4 * 1024 * 1024   # ~4 MiB doc tile amortizes step overhead
_MAX_TB = 256                          # keeps the finalize out of vreg spills


def _choose_tiles(B: int, F: int, itemsize: int):
    # Batch tile: multiple of 8, <= _MAX_TB, and keep >= 2 batch tiles when
    # B > 8 so the "parallel" grid axis shards across both TCs on v7x.
    if B <= 8:
        tb = 8
    else:
        tb = min(_MAX_TB, _round_up(pl.cdiv(B, 2), 8))
    # Feature tile: multiple of 128, sized so the doc tile hits the byte
    # target, never larger than needed to cover F.
    f_cap = _round_up(F, 128)
    tf = _round_up(max(_TARGET_TILE_BYTES // (tb * itemsize), 1), 128)
    tf = max(128, min(tf, f_cap))
    return tb, tf


@functools.partial(jax.jit, static_argnames=("tb", "tf"))
def bow_classifier_forward(doc, weight, bias, *, tb=None, tf=None):
    """doc: (B, F); weight: (L, F) (PyTorch nn.Linear layout); bias: (L,).

    Returns (B, L) f32 log-probabilities = log_softmax(doc @ weight.T + bias).
    """
    B, F = doc.shape
    L = weight.shape[0]

    auto_tb, auto_tf = _choose_tiles(B, F, doc.dtype.itemsize)
    tb = auto_tb if tb is None else tb
    tf = auto_tf if tf is None else tf

    grid = (pl.cdiv(B, tb), pl.cdiv(F, tf))

    # Pad only the (tiny) weight so the last (L, tf) weight tile holds real
    # zeros; doc's ragged tail is masked in-kernel instead of paying an extra
    # HBM pass to pad the largest array.
    F_pad = grid[1] * tf
    if F_pad != F:
        weight = jnp.pad(weight, ((0, 0), (0, F_pad - F)))
    bias2d = bias.reshape(1, L)

    # VMEM budget: double-buffered doc + weight tiles, f32 accumulator and
    # lane-padded output/bias, plus slack.  Well under v7x's 64 MiB physical.
    lanes_L = _round_up(L, 128)
    vmem_need = (2 * tb * tf * doc.dtype.itemsize
                 + 2 * _round_up(L, 8) * tf * weight.dtype.itemsize
                 + 3 * tb * lanes_L * 4
                 + 2 * 8 * lanes_L * 4)
    if vmem_need > (48 << 20):
        raise NotImplementedError(
            "label_dim / tile sizes too large for single-level tiling; the "
            "label axis would also need to be tiled.")
    vmem_limit = int(min(max(vmem_need + (4 << 20), 16 << 20), 48 << 20))

    out = pl.pallas_call(
        functools.partial(_bow_kernel, feat_dim=F, tf=tf),
        out_shape=jax.ShapeDtypeStruct((B, L), jnp.float32),
        grid_spec=pltpu.PrefetchScalarGridSpec(
            num_scalar_prefetch=0,
            grid=grid,
            in_specs=[
                pl.BlockSpec((tb, tf), lambda i, k: (i, k)),   # doc tile
                pl.BlockSpec((L, tf), lambda i, k: (0, k)),    # weight (F on lanes)
                pl.BlockSpec((1, L), lambda i, k: (0, 0)),     # bias
            ],
            out_specs=pl.BlockSpec((tb, L), lambda i, k: (i, 0)),
            scratch_shapes=[pltpu.VMEM((tb, L), jnp.float32)],
        ),
        compiler_params=pltpu.CompilerParams(
            # Batch tiles independent (megacore-shardable on v7x); F is the
            # carried reduction, so it is "arbitrary" and last.
            dimension_semantics=("parallel", "arbitrary"),
            vmem_limit_bytes=vmem_limit,
        ),
    )(doc, weight, bias2d)

    return out


def log_softmax_ref(x):
    m = jnp.max(x, axis=1, keepdims=True)
    s = x - m
    return s - jnp.log(jnp.sum(jnp.exp(s), axis=1, keepdims=True))


if __name__ == "__main__":
    # Small, module-consistent shapes (bag-of-words features -> class scores).
    batch, feat_dim, label_dim = 16, 512, 4

    key = jax.random.PRNGKey(0)
    k_x, k_w, k_b = jax.random.split(key, 3)

    # nn.Linear(feat_dim, label_dim) parameters, native PyTorch layout (L, F).
    bound = 1.0 / (feat_dim ** 0.5)
    weight = jax.random.uniform(
        k_w, (label_dim, feat_dim), jnp.float32, -bound, bound)
    bias = jax.random.uniform(k_b, (label_dim,), jnp.float32, -bound, bound)

    # Dense bag-of-words style input (counts).
    doc = jax.random.uniform(k_x, (batch, feat_dim), jnp.float32, 0.0, 3.0)
    ref = log_softmax_ref(doc @ weight.T + bias[None, :])

    # 1) Auto-sized tiles: byte-targeted tf, >=2 batch tiles, no doc padding.
    out = jax.block_until_ready(bow_classifier_forward(doc, weight, bias))
    assert out.shape == (batch, label_dim)
    assert jnp.allclose(out, ref, atol=1e-5, rtol=1e-5), "mismatch (auto tiles)"

    # 2) Small explicit tiles -> grid (2, 4): multi-step F reduction with
    #    accumulator init/finalize and batch tiling.
    out1 = jax.block_until_ready(
        bow_classifier_forward(doc, weight, bias, tb=8, tf=128))
    assert jnp.allclose(out1, ref, atol=1e-5, rtol=1e-5), "mismatch (tiled)"

    # 3) Ragged B and F (10, 300): exercises the in-kernel ragged-F mask and
    #    the ragged-B output writeback (no jnp.pad of doc anywhere).
    doc2 = jax.random.uniform(
        jax.random.PRNGKey(1), (10, 300), jnp.float32, 0.0, 3.0)
    w2 = jax.random.uniform(
        jax.random.PRNGKey(2), (label_dim, 300), jnp.float32, -bound, bound)
    ref2 = log_softmax_ref(doc2 @ w2.T + bias[None, :])
    out2 = jax.block_until_ready(
        bow_classifier_forward(doc2, w2, bias, tb=8, tf=128))
    assert out2.shape == (10, label_dim)
    assert jnp.allclose(out2, ref2, atol=1e-5, rtol=1e-5), "mismatch (ragged)"

    # 4) Ragged shapes with auto tiles (single partial F tile).
    out3 = jax.block_until_ready(bow_classifier_forward(doc2, w2, bias))
    assert jnp.allclose(out3, ref2, atol=1e-5, rtol=1e-5), "mismatch (ragged auto)"

    print("KERNEL_OK")
</pallas_src>

<mosaic_0001>
module attributes {stable_mosaic.version = 11 : i64} {
  func.func @_bow_kernel(%arg0: i32, %arg1: i32, %arg2: memref<8x512xf32, #tpu.memory_space<vmem>>, %arg3: memref<4x512xf32, #tpu.memory_space<vmem>>, %arg4: memref<1x4xf32, #tpu.memory_space<vmem>>, %arg5: memref<8x4xf32, #tpu.memory_space<vmem>>, %arg6: memref<8x4xf32, #tpu.memory_space<vmem>>) attributes {dimension_semantics = [#tpu.dimension_semantics<parallel>, #tpu.dimension_semantics<arbitrary>], iteration_bounds = array<i64: 2, 1>, scalar_prefetch = 0 : i64, scratch_operands = 1 : i64, tpu.core_type = #tpu.core_type<tc>, window_params = [{transform_indices = @transform_0, window_bounds = array<i64: 8, 512>}, {transform_indices = @transform_1, window_bounds = array<i64: 4, 512>}, {pipeline_mode = #tpu.pipeline_mode<synchronous>, transform_indices = @transform_2, window_bounds = array<i64: 1, 4>}, {transform_indices = @transform_3, window_bounds = array<i64: 8, 4>}]} {
    %c0_i32 = arith.constant 0 : i32
    %0 = arith.cmpi eq, %arg1, %c0_i32 : i32
    %1 = arith.extui %0 : i1 to i32
    %c0_i32_0 = arith.constant 0 : i32
    %2 = arith.cmpi ne, %1, %c0_i32_0 : i32
    scf.if %2 {
      %cst_10 = arith.constant 0.000000e+00 : f32
      %12 = vector.broadcast %cst_10 : f32 to vector<8x4xf32>
      %c0_11 = arith.constant 0 : index
      %c0_12 = arith.constant 0 : index
      %13 = vector.load %arg6[%c0_11, %c0_12] : memref<8x4xf32, #tpu.memory_space<vmem>>, vector<8x4xf32>
      tpu.vector_store %arg6[%c0_11, %c0_12], %12 {strides = array<i32>} : memref<8x4xf32, #tpu.memory_space<vmem>>, vector<8x4xf32>,
    } else {
    }
    %c0 = arith.constant 0 : index
    %c0_1 = arith.constant 0 : index
    %3 = vector.load %arg2[%c0, %c0_1] : memref<8x512xf32, #tpu.memory_space<vmem>>, vector<8x512xf32>
    %c0_2 = arith.constant 0 : index
    %c0_3 = arith.constant 0 : index
    %4 = vector.load %arg6[%c0_2, %c0_3] : memref<8x4xf32, #tpu.memory_space<vmem>>, vector<8x4xf32>
    %c0_4 = arith.constant 0 : index
    %c0_5 = arith.constant 0 : index
    %5 = vector.load %arg3[%c0_4, %c0_5] : memref<4x512xf32, #tpu.memory_space<vmem>>, vector<4x512xf32>
    %cst = arith.constant dense<0.000000e+00> : vector<8x4xf32>
    %6 = tpu.matmul %3, %5, %cst {dimension_numbers = #tpu.dot_dimension_numbers<[1], [1], [0], [0], [0, 0, 1, 0], [], []>} : vector<8x512xf32>, vector<4x512xf32>, vector<8x4xf32> -> vector<8x4xf32>
    %7 = arith.addf %4, %6 : vector<8x4xf32>
    %c0_6 = arith.constant 0 : index
    %c0_7 = arith.constant 0 : index
    %8 = vector.load %arg6[%c0_6, %c0_7] : memref<8x4xf32, #tpu.memory_space<vmem>>, vector<8x4xf32>
    tpu.vector_store %arg6[%c0_6, %c0_7], %7 {strides = array<i32>} : memref<8x4xf32, #tpu.memory_space<vmem>>, vector<8x4xf32>,
    %c0_i32_8 = arith.constant 0 : i32
    %9 = arith.cmpi eq, %arg1, %c0_i32_8 : i32
    %10 = arith.extui %9 : i1 to i32
    %c0_i32_9 = arith.constant 0 : i32
    %11 = arith.cmpi ne, %10, %c0_i32_9 : i32
    scf.if %11 {
      %c0_10 = arith.constant 0 : index
      %c0_11 = arith.constant 0 : index
      %12 = vector.load %arg6[%c0_10, %c0_11] : memref<8x4xf32, #tpu.memory_space<vmem>>, vector<8x4xf32>
      %c0_12 = arith.constant 0 : index
      %c0_13 = arith.constant 0 : index
      %13 = vector.load %arg4[%c0_12, %c0_13] : memref<1x4xf32, #tpu.memory_space<vmem>>, vector<1x4xf32>
      %14 = vector.broadcast %13 : vector<1x4xf32> to vector<8x4xf32>
      %15 = arith.addf %12, %14 : vector<8x4xf32>
      %cst_14 = arith.constant dense<0xFF800000> : vector<8xf32>
      %16 = vector.multi_reduction <maximumf>, %15, %cst_14 [1] : vector<8x4xf32> to vector<8xf32>
      %17 = vector.shape_cast %16 : vector<8xf32> to vector<8x1xf32>
      %18 = vector.broadcast %17 : vector<8x1xf32> to vector<8x4xf32>
      %19 = arith.subf %15, %18 : vector<8x4xf32>
      %20 = math.exp %19 : vector<8x4xf32>
      %cst_15 = arith.constant dense<0.000000e+00> : vector<8xf32>
      %21 = vector.multi_reduction <add>, %20, %cst_15 [1] : vector<8x4xf32> to vector<8xf32>
      %22 = vector.shape_cast %21 : vector<8xf32> to vector<8x1xf32>
      %23 = math.log %22 : vector<8x1xf32>
      %24 = vector.broadcast %23 : vector<8x1xf32> to vector<8x4xf32>
      %25 = arith.subf %19, %24 : vector<8x4xf32>
      %c0_16 = arith.constant 0 : index
      %c0_17 = arith.constant 0 : index
      %26 = vector.load %arg5[%c0_16, %c0_17] : memref<8x4xf32, #tpu.memory_space<vmem>>, vector<8x4xf32>
      tpu.vector_store %arg5[%c0_16, %c0_17], %25 {strides = array<i32>} : memref<8x4xf32, #tpu.memory_space<vmem>>, vector<8x4xf32>,
    } else {
    }
    return
  }
  func.func @transform_0(%arg0: i32, %arg1: i32) -> (i32, i32) {
    %c0_i32 = arith.constant 0 : i32
    return %arg0, %arg1 : i32, i32
  }
  func.func @transform_1(%arg0: i32, %arg1: i32) -> (i32, i32) {
    %c0_i32 = arith.constant 0 : i32
    %c0_i32_0 = arith.constant 0 : i32
    return %c0_i32, %arg1 : i32, i32
  }
  func.func @transform_2(%arg0: i32, %arg1: i32) -> (i32, i32) {
    %c0_i32 = arith.constant 0 : i32
    %c0_i32_0 = arith.constant 0 : i32
    %c0_i32_1 = arith.constant 0 : i32
    return %c0_i32, %c0_i32_0 : i32, i32
  }
  func.func @transform_3(%arg0: i32, %arg1: i32) -> (i32, i32) {
    %c0_i32 = arith.constant 0 : i32
    %c0_i32_0 = arith.constant 0 : i32
    return %arg0, %c0_i32 : i32, i32
  }
}

</mosaic_0001>

<llo_original>
// kernel: bow_classifier_forward.1
$region0: #{bow_classifier_forward.1}
  #allocation0 [shape = 'u32[]', space=smem, size = 0x4, offset = 0x4, fixed_abs, tag = 'smem constant byte address 0x4 - core index']
  #allocation1 [shape = 'u32[144,128]{1,0:T(1,128)}', space=vmem, size = 0x12000, scoped, tag = 'internal scratch']
  #allocation2 [shape = 'f32[8,4]{1,0:T(8,128)}', space=vmem, size = 0x1000, scoped, tag = 'scratch operand']
  %s0 = inlined_call_operand.hbm [shape: f32[16,512], index: 0, kind: input, shape index: {}]
  %s1 = inlined_call_operand.hbm [shape: f32[4,512], index: 1, kind: input, shape index: {}]
  %s2 = inlined_call_operand.vmem [shape: f32[1,4], index: 2, kind: input, shape index: {}]
  %s3 = inlined_call_operand.vmem [shape: f32[16,4], index: 3, kind: output, shape index: {}]
  %s4 = sld [smem:[#allocation0]]
  $region61: #{bow_classifier_forward.1} parent=0
    _
  %s6 = ssub.s32 1, %s4
  %s7 = scalar_select 0, %s6, %s4
  $region1: #{bow_classifier_forward.1} parent=0
    #allocation3 [shape = 'u8[32768]{0}', space=vmem, size = 0x8000, scoped, tag = 'input window, operand 0']
    #allocation4 [shape = 's32[2]{0}', space=sflag, size = 0x8, scoped, tag = 'scoped memory for bow_classifier_forward.1']
    #allocation5 [shape = 'u8[8192]{0}', space=vmem, size = 0x2000, scoped, tag = 'input window, operand 1, single buffered']
    #allocation6 [shape = 's32[1]{0}', space=sflag, size = 0x4, scoped, tag = 'scoped memory for bow_classifier_forward.1']
    %8 = vsyncpa [#allocation4], 0
    %s9 = scalar_lea.sflag [#allocation4], 1
    %10 = vsyncpa %s9, 0
    %11 = vsyncpa [#allocation6], 0
    loop: start=0, step=1, limit=4
    $region2: #{bow_classifier_forward.1} parent=1 // loop_pre_header
      _
    $region3: #{bow_classifier_forward.1} parent=1 // loop_header
      %s13 = sphi 0, %s17
      %p14 = scmp.ge.s32.totalorder %s13, 4
      %s20 = sphi 0, %s32
      %s21 = sphi 0, %s28
      %s22 = sphi 0, %s20
      %s23 = sphi 0, %s21
      %s24 = sphi 0, %s22
      %s25 = sphi 0, %s23
      %s37 = sphi 0, %s39
      %s40 = sphi 0, %s37
      %s41 = sphi 0, %s40
      %s57 = sphi 0, %s41
      %s63 = sphi 0, %s65
      %s66 = sphi 0, %s63
      %s67 = sphi 0, %s66
      %s83 = sphi 0, %s67
      %s87 = sphi 0, %s87
      %s89 = sphi 0, %s87
      %s90 = sphi 0, %s89
      %s104 = sphi 0, %s90
      %s110 = sphi 0, %s112
      %s113 = sphi 0, %s110
      %s114 = sphi 0, %s113
      %s130 = sphi 0, %s114
    $region4: #{bow_classifier_forward.1} parent=1 // loop_header_branch
      %16 = sbr.rel (%p14) target = $region8
    $region5: #{bow_classifier_forward.1} parent=1 // loop_body
      %s18 = ssub.s32 %s13, 1
      %s19 = ssub.s32 %s13, 2
      %s26 = sadd.s32 1, %s21
      %p27 = scmp.ge.s32.totalorder %s26, 1
      %s28 = scalar_select %p27, 0, %s26
      %s29 = sadd.s32 1, %s20
      %s30 = scalar_select %p27, %s29, %s20
      %p31 = scmp.ge.s32.totalorder %s30, 2
      %s32 = scalar_select %p31, 0, %s30
      %s33 = ssub.s32 %s20, %s32
      %s34 = ssub.s32 %s21, %s28
      %s35 = sor.u32 %s33, %s34
      %p36 = scmp.eq.s32.totalorder %s35, 0
      %s38 = sadd.s32 %s37, 1
      %s39 = scalar_select %p36, %s37, %s38
      %p42 = pneg %p36
      %p43 = scmp.eq.s32.totalorder %s13, 1
      %p44 = por %p42, %p43
      %p45 = scmp.ne.s32.totalorder %s37, %s40
      %p46 = scmp.eq.s32.totalorder %s13, 0
      %p47 = por %p45, %p46
      %p48 = scmp.ne.s32.totalorder %s37, %s40
      %p49 = scmp.eq.s32.totalorder %s18, 1
      %p50 = por %p48, %p49
      %p51 = scmp.ne.s32.totalorder %s40, %s41
      %p52 = scmp.eq.s32.totalorder %s18, 0
      %p53 = por %p51, %p52
      %p54 = scmp.ne.s32.totalorder %s40, %s41
      %p55 = scmp.eq.s32.totalorder %s19, 1
      %p56 = por %p54, %p55
      %p58 = scmp.ne.s32.totalorder %s41, %s57
      %p59 = scmp.eq.s32.totalorder %s19, 0
      %p60 = por %p58, %p59
      %s61 = ssub.s32 %s21, %s28
      %p62 = scmp.eq.s32.totalorder %s61, 0
      %s64 = sadd.s32 %s63, 1
      %s65 = scalar_select %p62, %s63, %s64
      %p68 = pneg %p62
      %p69 = scmp.eq.s32.totalorder %s13, 1
      %p70 = por %p68, %p69
      %p71 = scmp.ne.s32.totalorder %s63, %s66
      %p72 = scmp.eq.s32.totalorder %s13, 0
      %p73 = por %p71, %p72
      %p74 = scmp.ne.s32.totalorder %s63, %s66
      %p75 = scmp.eq.s32.totalorder %s18, 1
      %p76 = por %p74, %p75
      %p77 = scmp.ne.s32.totalorder %s66, %s67
      %p78 = scmp.eq.s32.totalorder %s18, 0
      %p79 = por %p77, %p78
      %p80 = scmp.ne.s32.totalorder %s66, %s67
      %p81 = scmp.eq.s32.totalorder %s19, 1
      %p82 = por %p80, %p81
      %p84 = scmp.ne.s32.totalorder %s67, %s83
      %p85 = scmp.eq.s32.totalorder %s19, 0
      %p86 = por %p84, %p85
      %s88 = sadd.s32 %s87, 1
      %p91 = scmp.eq.s32.totalorder %s13, 1
      %p92 = scmp.ne.s32.totalorder %s87, %s89
      %p93 = scmp.eq.s32.totalorder %s13, 0
      %p94 = por %p92, %p93
      %p95 = scmp.ne.s32.totalorder %s87, %s89
      %p96 = scmp.eq.s32.totalorder %s18, 1
      %p97 = por %p95, %p96
      %p98 = scmp.ne.s32.totalorder %s89, %s90
      %p99 = scmp.eq.s32.totalorder %s18, 0
      %p100 = por %p98, %p99
      %p101 = scmp.ne.s32.totalorder %s89, %s90
      %p102 = scmp.eq.s32.totalorder %s19, 1
      %p103 = por %p101, %p102
      %p105 = scmp.ne.s32.totalorder %s90, %s104
      %p106 = scmp.eq.s32.totalorder %s19, 0
      %p107 = por %p105, %p106
      %s108 = ssub.s32 %s20, %s32
      %p109 = scmp.eq.s32.totalorder %s108, 0
      %s111 = sadd.s32 %s110, 1
      %s112 = scalar_select %p109, %s110, %s111
      %p115 = pneg %p109
      %p116 = scmp.eq.s32.totalorder %s13, 1
      %p117 = por %p115, %p116
      %p118 = scmp.ne.s32.totalorder %s110, %s113
      %p119 = scmp.eq.s32.totalorder %s13, 0
      %p120 = por %p118, %p119
      %p121 = scmp.ne.s32.totalorder %s110, %s113
      %p122 = scmp.eq.s32.totalorder %s18, 1
      %p123 = por %p121, %p122
      %p124 = scmp.ne.s32.totalorder %s113, %s114
      %p125 = scmp.eq.s32.totalorder %s18, 0
      %p126 = por %p124, %p125
      %p127 = scmp.ne.s32.totalorder %s113, %s114
      %p128 = scmp.eq.s32.totalorder %s19, 1
      %p129 = por %p127, %p128
      %p131 = scmp.ne.s32.totalorder %s114, %s130
      %p132 = scmp.eq.s32.totalorder %s19, 0
      %p133 = por %p131, %p132
      %p134 = scmp.le.s32.totalorder 1, %s13
      %p135 = scmp.lt.s32.totalorder %s13, 3
      %p136 = pnand %p134, %p135
      %p137 = pneg %p136
      // Predicated region
      $region9: #{bow_classifier_forward.1} parent=5 // pred_check
        _
      $region10: #{bow_classifier_forward.1} parent=5 // pred_check_branch
        %139 = sbr.rel (%p136) target = $region12
      $region11: #{bow_classifier_forward.1} parent=5 // pred_region
        %s140 = ssub.s32 %s13, 1
        // Predicated region
        $region13: #{bow_classifier_forward.1} parent=11 // pred_check
          %p141 = pneg %p79
        $region14: #{bow_classifier_forward.1} parent=11 // pred_check_branch
          %143 = sbr.rel (%p141) target = $region16
        $region15: #{bow_classifier_forward.1} parent=11 // pred_region
          %s144 = smul.u32 4, %s23
          %s146 = ssub.s32 256, 256
          %147 = vsyncadd [#allocation6], %s146
          %s148 = smul.addr %s144, 64
          %s149 = scalar_lea.hbm %s1, %s148
          %s151 = sshll.u32 [#allocation5], 4
          %s152 = int_to_ptr.vmem [resolvable:$true] %s151
          %154 = dma.hbm_to_vmem [thread:$0]  %s149, 256, %s152, [#allocation6]
        $region16: #{bow_classifier_forward.1} parent=11 // pred_fallthru
          _
        // Predicated region
        $region17: #{bow_classifier_forward.1} parent=11 // pred_check
          %p155 = pneg %p100
        $region18: #{bow_classifier_forward.1} parent=11 // pred_check_branch
          %157 = sbr.rel (%p155) target = $region20
        $region19: #{bow_classifier_forward.1} parent=11 // pred_region
          _
        $region20: #{bow_classifier_forward.1} parent=11 // pred_fallthru
          _
      $region12: #{bow_classifier_forward.1} parent=5 // pred_fallthru
        _
      %p158 = scmp.lt.s32.totalorder %s13, 2
      // Predicated region
      $region21: #{bow_classifier_forward.1} parent=5 // pred_check
        %p159 = pneg %p158
      $region22: #{bow_classifier_forward.1} parent=5 // pred_check_branch
        %161 = sbr.rel (%p159) target = $region24
      $region23: #{bow_classifier_forward.1} parent=5 // pred_region
        // Predicated region
        $region25: #{bow_classifier_forward.1} parent=23 // pred_check
          %p162 = pneg %p47
        $region26: #{bow_classifier_forward.1} parent=23 // pred_check_branch
          %164 = sbr.rel (%p162) target = $region28
        $region27: #{bow_classifier_forward.1} parent=23 // pred_region
          %s165 = sand.u32 %s37, 1
          %s166 = scalar_lea.sflag [#allocation4], %s165
          %s167 = sand.u32 %s37, 1
          %s168 = smul.addr %s167, 32
          %s169 = scalar_lea.vmem [#allocation3], %s168
          %s170 = smul.u32 4, %s21
          %s172 = ssub.s32 512, 512
          %173 = vsyncadd %s166, %s172
          %s174 = smul.addr %s20, 4
          %s175 = sadd.s32 %s170, %s174
          %s176 = smul.addr %s175, 128
          %s177 = scalar_lea.hbm %s0, %s176
          %s179 = sshll.u32 %s169, 4
          %s180 = int_to_ptr.vmem [resolvable:$true] %s179
          %182 = dma.hbm_to_vmem [thread:$0]  %s177, 512, %s180, %s166
        $region28: #{bow_classifier_forward.1} parent=23 // pred_fallthru
          _
      $region24: #{bow_classifier_forward.1} parent=5 // pred_fallthru
        _
      %p183 = scmp.le.s32.totalorder 1, %s13
      %p184 = scmp.lt.s32.totalorder %s13, 3
      %p185 = pnand %p183, %p184
      %p186 = pneg %p185
      // Predicated region
      $region29: #{bow_classifier_forward.1} parent=5 // pred_check
        _
      $region30: #{bow_classifier_forward.1} parent=5 // pred_check_branch
        %188 = sbr.rel (%p185) target = $region32
      $region31: #{bow_classifier_forward.1} parent=5 // pred_region
        %s189 = ssub.s32 %s13, 1
        %s190 = sand.u32 %s40, 1
        %s191 = scalar_lea.sflag [#allocation4], %s190
        %s192 = sand.u32 %s40, 1
        %s193 = smul.addr %s192, 32
        %s194 = scalar_lea.vmem [#allocation3], %s193
        // Predicated region
        $region33: #{bow_classifier_forward.1} parent=31 // pred_check
          %p195 = pneg %p53
        $region34: #{bow_classifier_forward.1} parent=31 // pred_check_branch
          %197 = sbr.rel (%p195) target = $region36
        $region35: #{bow_classifier_forward.1} parent=31 // pred_region
          %198 = dma.done %s191, 512
        $region36: #{bow_classifier_forward.1} parent=31 // pred_fallthru
          _
        // Predicated region
        $region37: #{bow_classifier_forward.1} parent=31 // pred_check
          %p199 = pneg %p79
        $region38: #{bow_classifier_forward.1} parent=31 // pred_check_branch
          %201 = sbr.rel (%p199) target = $region40
        $region39: #{bow_classifier_forward.1} parent=31 // pred_region
          %202 = dma.done [#allocation6], 256
        $region40: #{bow_classifier_forward.1} parent=31 // pred_fallthru
          _
        %s203 = sand.u32 %s40, 1
        %s204 = scalar_lea.sflag [#allocation4], %s203
        %s205 = sand.u32 %s40, 1
        %s206 = smul.addr %s205, 32
        %s207 = scalar_lea.vmem [#allocation3], %s206
        %p208 = pneg %p53
        %p209 = pneg %p50
        %p210 = pneg %p79
        %p211 = pneg %p76
        %p212 = pneg %p100
        %p213 = pneg %p97
        %p214 = pneg %p126
        %p215 = pneg %p123
        %p216 = scmp.lt.s32.totalorder %s22, 1
        %s217 = scalar_select %p216, %s22, 1
        %s218 = smul.addr %s217, 8
        %s219 = scalar_lea.vmem %s3, %s218
        %s220 = smul.u32 4, %s23
        %s221 = smul.u32 4, %s23
        %p222 = scmp.lt.s32.totalorder %s22, 1
        %s223 = scalar_select %p222, %s22, 1
        %s224 = smul.addr %s223, 8
        %s225 = scalar_lea.vmem %s3, %s224
        %p226 = scmp.eq.s32.totalorder %s23, 0
        // Predicated region
        $region41: #{bow_classifier_forward.1} parent=31 // pred_check
          %p227 = pneg %p226
        $region42: #{bow_classifier_forward.1} parent=31 // pred_check_branch
          %229 = sbr.rel (%p227) target = $region44
        $region43: #{bow_classifier_forward.1} parent=31 // pred_region
          %vm230 = vcmask 31744
          %231 = vst.msk [vmem:[#allocation2] sm:$0xff] %vm230, 0.0
        $region44: #{bow_classifier_forward.1} parent=31 // pred_fallthru
          _
        %v232 = vld [vmem:[%s194] sm:$0xff]
        %v233 = vld [vmem:[%s194 + $0x8] sm:$0xff]
        %v234 = vld [vmem:[%s194 + $0x10] sm:$0xff]
        %v235 = vld [vmem:[%s194 + $0x18] sm:$0xff]
        %v236 = vld [vmem:[#allocation2] sm:$0xff]
        %v237 = vld [vmem:[#allocation5] sm:$0xff]
        %v238 = vld [vmem:[#allocation5 + $0x8] sm:$0xff]
        %v241 = vcombine.high %v237, %v237
        %v242 = vcombine.high %v238, %v238
        %245 = vmatprep.subr.mxu0 %v241
        %246 = vmatpush1.xpose.msra.mxu0 %v237
        %247 = vmatprep.subr.mxu0 0.0
        %248 = vmatpush1.xpose.msra.mxu0 0.0
        %249 = vmatprep.subr.mxu0 0.0
        %250 = vmatpush1.xpose.msra.mxu0 0.0
        %251 = vmatprep.subr.mxu0 0.0
        %252 = vmatpush1.xpose.msra.mxu0 0.0
        %253 = vmatprep.subr.mxu0 0.0
        %254 = vmatpush1.xpose.msra.mxu0 0.0
        %255 = vmatprep.subr.mxu0 0.0
        %256 = vmatpush1.xpose.msra.mxu0 0.0
        %257 = vmatprep.subr.mxu0 0.0
        %258 = vmatpush1.xpose.msra.mxu0 0.0
        %259 = vmatprep.subr.mxu0 0.0
        %260 = vmatpush1.xpose.msra.mxu0 0.0
        %261 = vmatprep.subr.mxu0 0.0
        %262 = vmatpush1.xpose.msra.mxu0 0.0
        %263 = vmatprep.subr.mxu0 0.0
        %264 = vmatpush1.xpose.msra.mxu0 0.0
        %265 = vmatprep.subr.mxu0 0.0
        %266 = vmatpush1.xpose.msra.mxu0 0.0
        %267 = vmatprep.subr.mxu0 0.0
        %268 = vmatpush1.xpose.msra.mxu0 0.0
        %269 = vmatprep.subr.mxu0 0.0
        %270 = vmatpush1.xpose.msra.mxu0 0.0
        %271 = vmatprep.subr.mxu0 0.0
        %272 = vmatpush1.xpose.msra.mxu0 0.0
        %273 = vmatprep.subr.mxu0 0.0
        %274 = vmatpush1.xpose.msra.mxu0 0.0
        %275 = vmatprep.subr.mxu0 0.0
        %276 = vmatpush1.xpose.msra.mxu0 0.0
        %277 = vmatprep.subr.mxu0 0.0
        %278 = vmatpush1.xpose.msra.mxu0 0.0
        %279 = vmatprep.subr.mxu0 0.0
        %280 = vmatpush1.xpose.msra.mxu0 0.0
        %281 = vmatprep.subr.mxu0 0.0
        %282 = vmatpush1.xpose.msra.mxu0 0.0
        %283 = vmatprep.subr.mxu0 0.0
        %284 = vmatpush1.xpose.msra.mxu0 0.0
        %285 = vmatprep.subr.mxu0 0.0
        %286 = vmatpush1.xpose.msra.mxu0 0.0
        %287 = vmatprep.subr.mxu0 0.0
        %288 = vmatpush1.xpose.msra.mxu0 0.0
        %289 = vmatprep.subr.mxu0 0.0
        %290 = vmatpush1.xpose.msra.mxu0 0.0
        %291 = vmatprep.subr.mxu0 0.0
        %292 = vmatpush1.xpose.msra.mxu0 0.0
        %293 = vmatprep.subr.mxu0 0.0
        %294 = vmatpush1.xpose.msra.mxu0 0.0
        %295 = vmatprep.subr.mxu0 0.0
        %296 = vmatpush1.xpose.msra.mxu0 0.0
        %297 = vmatprep.subr.mxu0 0.0
        %298 = vmatpush1.xpose.msra.mxu0 0.0
        %299 = vmatprep.subr.mxu0 0.0
        %300 = vmatpush1.xpose.msra.mxu0 0.0
        %301 = vmatprep.subr.mxu0 0.0
        %302 = vmatpush1.xpose.msra.mxu0 0.0
        %303 = vmatprep.subr.mxu0 0.0
        %304 = vmatpush1.xpose.msra.mxu0 0.0
        %305 = vmatprep.subr.mxu0 0.0
        %306 = vmatpush1.xpose.msra.mxu0 0.0
        %307 = vmatprep.subr.mxu0 0.0
        %308 = vmatpush1.xpose.msra.mxu0 0.0
        %309 = vmatprep.mubr.f32.mxu0 %v233
        %310 = vmatmul.mubr.f32.gmra.mrb[0].mxu0 %v232
        %v311 = vpop.f32.mrb[0].mxu0
        %v312 = vadd.f32 0.0, %v311
        %v313 = vpop.f32.mrb[0].mxu0
        %314 = vdwg.mxu0
        %315 = vmatprep.subr.mxu0 %v242
        %316 = vmatpush1.xpose.msra.mxu0 %v238
        %317 = vmatprep.subr.mxu0 0.0
        %318 = vmatpush1.xpose.msra.mxu0 0.0
        %319 = vmatprep.subr.mxu0 0.0
        %320 = vmatpush1.xpose.msra.mxu0 0.0
        %321 = vmatprep.subr.mxu0 0.0
        %322 = vmatpush1.xpose.msra.mxu0 0.0
        %323 = vmatprep.subr.mxu0 0.0
        %324 = vmatpush1.xpose.msra.mxu0 0.0
        %325 = vmatprep.subr.mxu0 0.0
        %326 = vmatpush1.xpose.msra.mxu0 0.0
        %327 = vmatprep.subr.mxu0 0.0
        %328 = vmatpush1.xpose.msra.mxu0 0.0
        %329 = vmatprep.subr.mxu0 0.0
        %330 = vmatpush1.xpose.msra.mxu0 0.0
        %331 = vmatprep.subr.mxu0 0.0
        %332 = vmatpush1.xpose.msra.mxu0 0.0
        %333 = vmatprep.subr.mxu0 0.0
        %334 = vmatpush1.xpose.msra.mxu0 0.0
        %335 = vmatprep.subr.mxu0 0.0
        %336 = vmatpush1.xpose.msra.mxu0 0.0
        %337 = vmatprep.subr.mxu0 0.0
        %338 = vmatpush1.xpose.msra.mxu0 0.0
        %339 = vmatprep.subr.mxu0 0.0
        %340 = vmatpush1.xpose.msra.mxu0 0.0
        %341 = vmatprep.subr.mxu0 0.0
        %342 = vmatpush1.xpose.msra.mxu0 0.0
        %343 = vmatprep.subr.mxu0 0.0
        %344 = vmatpush1.xpose.msra.mxu0 0.0
        %345 = vmatprep.subr.mxu0 0.0
        %346 = vmatpush1.xpose.msra.mxu0 0.0
        %347 = vmatprep.subr.mxu0 0.0
        %348 = vmatpush1.xpose.msra.mxu0 0.0
        %349 = vmatprep.subr.mxu0 0.0
        %350 = vmatpush1.xpose.msra.mxu0 0.0
        %351 = vmatprep.subr.mxu0 0.0
        %352 = vmatpush1.xpose.msra.mxu0 0.0
        %353 = vmatprep.subr.mxu0 0.0
        %354 = vmatpush1.xpose.msra.mxu0 0.0
        %355 = vmatprep.subr.mxu0 0.0
        %356 = vmatpush1.xpose.msra.mxu0 0.0
        %357 = vmatprep.subr.mxu0 0.0
        %358 = vmatpush1.xpose.msra.mxu0 0.0
        %359 = vmatprep.subr.mxu0 0.0
        %360 = vmatpush1.xpose.msra.mxu0 0.0
        %361 = vmatprep.subr.mxu0 0.0
        %362 = vmatpush1.xpose.msra.mxu0 0.0
        %363 = vmatprep.subr.mxu0 0.0
        %364 = vmatpush1.xpose.msra.mxu0 0.0
        %365 = vmatprep.subr.mxu0 0.0
        %366 = vmatpush1.xpose.msra.mxu0 0.0
        %367 = vmatprep.subr.mxu0 0.0
        %368 = vmatpush1.xpose.msra.mxu0 0.0
        %369 = vmatprep.subr.mxu0 0.0
        %370 = vmatpush1.xpose.msra.mxu0 0.0
        %371 = vmatprep.subr.mxu0 0.0
        %372 = vmatpush1.xpose.msra.mxu0 0.0
        %373 = vmatprep.subr.mxu0 0.0
        %374 = vmatpush1.xpose.msra.mxu0 0.0
        %375 = vmatprep.subr.mxu0 0.0
        %376 = vmatpush1.xpose.msra.mxu0 0.0
        %377 = vmatprep.subr.mxu0 0.0
        %378 = vmatpush1.xpose.msra.mxu0 0.0
        %379 = vmatprep.mubr.f32.mxu0 %v235
        %380 = vmatmul.mubr.f32.gmra.mrb[0].mxu0 %v234
        %v381 = vpop.f32.mrb[0].mxu0
        %v382 = vadd.f32 %v312, %v381
        %v383 = vpop.f32.mrb[0].mxu0
        %384 = vdwg.mxu0
        %v385 = vadd.f32 %v236, %v382
        %vm386 = vcmask 31744
        %387 = vst.msk [vmem:[#allocation2] sm:$0xff] %vm386, %v385
        // Predicated region
        $region45: #{bow_classifier_forward.1} parent=31 // pred_check
          %p388 = pneg %p226
        $region46: #{bow_classifier_forward.1} parent=31 // pred_check_branch
          %390 = sbr.rel (%p388) target = $region48
        $region47: #{bow_classifier_forward.1} parent=31 // pred_region
          %v391 = vld [vmem:[#allocation2] sm:$0xff]
          %v392 = vld [vmem:[%s2] sm:$0x1]
          %v394 = vlaneseq
          %v395 = vshrl.u32 %v394, 7
          %v396 = vsub.s32 0, %v395
          %v397 = vrot.slane %v392, %v396
          %v399 = vadd.f32 %v391, %v397
          %v400 = vsel %vm386, %v399, -inf
          %401 = vmax.xlane.f32.xlu0 %v400
          %v402 = vpop.xlane.xlu0 %401
          %v403 = vsub.f32 %v399, %v402
          %v404 = vmul.f32 %v403, 1.442695
          %v405 = vpow.pop %v404
          %v406 = vsel %vm386, %v405, 0.0
          %407 = vadd.xlane.f32.xlu0 %v406
          %v408 = vpop.xlane.xlu0 %407
          %v409 = vlog2.pop %v408
          %v410 = vmul.f32 %v409, 0.6931472
          %v411 = vsub.f32 %v403, %v410
          %412 = vst.msk [vmem:[%s225] sm:$0xff] %vm386, %v411
        $region48: #{bow_classifier_forward.1} parent=31 // pred_fallthru
          _
        %p413 = scmp.lt.s32.totalorder %s22, 1
        %s414 = scalar_select %p413, %s22, 1
        %s415 = smul.addr %s414, 8
        %s416 = scalar_lea.vmem %s3, %s415
        // Predicated region
        $region49: #{bow_classifier_forward.1} parent=31 // pred_check
          %p417 = pneg %p123
        $region50: #{bow_classifier_forward.1} parent=31 // pred_check_branch
          %419 = sbr.rel (%p417) target = $region52
        $region51: #{bow_classifier_forward.1} parent=31 // pred_region
          _
        $region52: #{bow_classifier_forward.1} parent=31 // pred_fallthru
          _
      $region32: #{bow_classifier_forward.1} parent=5 // pred_fallthru
        _
      %p420 = scmp.le.s32.totalorder 2, %s13
      // Predicated region
      $region53: #{bow_classifier_forward.1} parent=5 // pred_check
        %p421 = pneg %p420
      $region54: #{bow_classifier_forward.1} parent=5 // pred_check_branch
        %423 = sbr.rel (%p421) target = $region56
      $region55: #{bow_classifier_forward.1} parent=5 // pred_region
        %s424 = ssub.s32 %s13, 2
        // Predicated region
        $region57: #{bow_classifier_forward.1} parent=55 // pred_check
          %p425 = pneg %p129
        $region58: #{bow_classifier_forward.1} parent=55 // pred_check_branch
          %427 = sbr.rel (%p425) target = $region60
        $region59: #{bow_classifier_forward.1} parent=55 // pred_region
          %p428 = scmp.lt.s32.totalorder %s24, 1
          %s429 = scalar_select %p428, %s24, 1
          %s430 = smul.addr %s429, 8
          %s431 = scalar_lea.vmem %s3, %s430
        $region60: #{bow_classifier_forward.1} parent=55 // pred_fallthru
          _
      $region56: #{bow_classifier_forward.1} parent=5 // pred_fallthru
        _
    $region6: #{bow_classifier_forward.1} parent=1 // loop_footer
      %s17 = sadd.s32 1, %s13
    $region7: #{bow_classifier_forward.1} parent=1 // loop_footer_branch
      %12 = sbr.rel target = $region3
    $region8: #{bow_classifier_forward.1} parent=1 // loop_exit
      _
    %432 = vsyncpa [#allocation4], 1
    %s433 = scalar_lea.sflag [#allocation4], 1
    %434 = vsyncpa %s433, 1
    %435 = vsyncpa [#allocation6], 1

</llo_original>
